<compile_context>
chip_gen: v7x
topology: tpu7x:2x2x1
jax: 0.10.0
libtpu: 0.0.40
codegen_flags: <defaults>
</compile_context>

<pallas_src>
import functools

import jax
import jax.numpy as jnp
from jax.experimental import pallas as pl
from jax.experimental.pallas import tpu as pltpu


_LANE_TILE = 128          # lane width of every tile (multiple of 128)
_MAX_BLOCK_ROWS = 2048    # 2048 x 128 lanes = 256K batch elems per block


def _classifier_kernel(w1_ref, b1_ref, w2_ref, b2_ref, x_ref, o_ref, *, hidden):
    # x_ref: (2, TM, 128) f32 in VMEM -- two dense per-feature planes.
    # w1_ref: (2*H,) f32 SMEM, laid out as [j*2 + k] (hidden unit j, input k).
    # b1_ref: (H,), w2_ref: (H,), b2_ref: (1,) f32 SMEM scalars.
    # o_ref: (TM, 128) f32 -- sublane+lane dense output tile.
    x0 = x_ref[0]                            # (TM, 128)
    x1 = x_ref[1]                            # (TM, 128)
    acc = b2_ref[0]                          # scalar, broadcasts on first add
    for j in range(hidden):                  # hidden is a Python const -> unrolled
        pre = w1_ref[2 * j] * x0 + w1_ref[2 * j + 1] * x1 + b1_ref[j]  # VPU FMAs
        acc = acc + w2_ref[j] * jnp.tanh(pre)                          # tanh on EUP
    # sigmoid(z) == 0.5 * tanh(0.5 * z) + 0.5  -> single EUP transcendental.
    o_ref[...] = 0.5 * jnp.tanh(0.5 * acc) + 0.5


def _round_up(x, m):
    return (x + m - 1) // m * m


def _choose_block_rows(rows):
    if rows <= 8:
        return rows                          # full-dim block (no 8-alignment needed)
    tm = _round_up(pl.cdiv(rows, 2), 8)      # >= 2 grid steps (v7x has 2 TensorCores)
    return min(_MAX_BLOCK_ROWS, tm)


def classifier_forward(x, w1, b1, w2, b2, *, min_pallas_batch=256):
    """Forward pass of Classifier.

    x: (N, 2); w1: (2, H); b1: (H,); w2: (H, 1); b2: (1,). Returns (N, 1) f32.
    (PyTorch stores Linear weights as (out, in); pre-transpose to (in, out).)
    """
    n, f_in = x.shape
    assert f_in == 2
    hidden = w1.shape[1]

    x = x.astype(jnp.float32)
    w1 = w1.astype(jnp.float32)
    b1 = b1.astype(jnp.float32)
    w2 = w2.astype(jnp.float32)
    b2 = b2.astype(jnp.float32)

    # Tiny batches: a pallas_call launch dwarfs ~100 FLOPs -> let XLA fuse it.
    # Large hidden sizes: the contraction belongs on the MXU -> XLA handles it.
    if n < min_pallas_batch or hidden > 32:
        return jax.nn.sigmoid(jnp.tanh(x @ w1 + b1) @ w2 + b2)

    n_pad = _round_up(n, _LANE_TILE)         # minimal padding (<= 127 elements)
    rows = n_pad // _LANE_TILE
    tm = _choose_block_rows(rows)
    grid = pl.cdiv(rows, tm)

    # Feature-major, sublane+lane dense layout: (2, rows, 128).
    # TODO(synk): fold this transpose into the kernel (even/odd lane
    # deinterleave of the row-major (N, 2) layout) to drop the last extra HBM
    # pass; Mosaic has no clean lane-granularity deinterleave primitive.
    xt = x.T                                 # (2, N)
    if n_pad != n:
        xt = jnp.pad(xt, ((0, 0), (0, n_pad - n)))
    x3 = xt.reshape(2, rows, _LANE_TILE)

    w1_flat = w1.T.reshape(-1)               # index [2*j + k]
    b1_flat = b1.reshape(-1)
    w2_flat = w2.reshape(-1)
    b2_flat = b2.reshape(-1)

    smem_spec = pl.BlockSpec(memory_space=pltpu.MemorySpace.SMEM)

    out2d = pl.pallas_call(
        functools.partial(_classifier_kernel, hidden=hidden),
        out_shape=jax.ShapeDtypeStruct((rows, _LANE_TILE), jnp.float32),
        grid=(grid,),
        in_specs=[
            smem_spec,                                            # w1 scalars
            smem_spec,                                            # b1
            smem_spec,                                            # w2
            smem_spec,                                            # b2
            pl.BlockSpec((2, tm, _LANE_TILE), lambda i: (0, i, 0)),  # x planes
        ],
        out_specs=pl.BlockSpec((tm, _LANE_TILE), lambda i: (i, 0)),
        compiler_params=pltpu.CompilerParams(
            dimension_semantics=("parallel",),                    # megacore-shardable
        ),
    )(w1_flat, b1_flat, w2_flat, b2_flat, x3)

    out = out2d.reshape(-1)                  # free: row-major == batch order
    if n_pad != n:
        out = out[:n]                        # only copies when N % 128 != 0
    return out.reshape(n, 1)


def _reference(x, w1, b1, w2, b2):
    h = jnp.tanh(x @ w1 + b1)
    return jax.nn.sigmoid(h @ w2 + b2)


if __name__ == "__main__":
    key = jax.random.PRNGKey(0)
    k_x, k_w1, k_b1, k_w2, k_b2 = jax.random.split(key, 5)

    # batch=1024 (exercises the Pallas path), input_size=2, hidden=4
    N, F_IN, H = 1024, 2, 4

    x = jax.random.normal(k_x, (N, F_IN), dtype=jnp.float32)

    # Deterministic synthetic params (PyTorch-style uniform init bounds).
    bound1 = 1.0 / (F_IN ** 0.5)
    w1 = jax.random.uniform(k_w1, (F_IN, H), jnp.float32, -bound1, bound1)
    b1 = jax.random.uniform(k_b1, (H,), jnp.float32, -bound1, bound1)
    bound2 = 1.0 / (H ** 0.5)
    w2 = jax.random.uniform(k_w2, (H, 1), jnp.float32, -bound2, bound2)
    b2 = jax.random.uniform(k_b2, (1,), jnp.float32, -bound2, bound2)

    ref = _reference(x, w1, b1, w2, b2)

    # Main Pallas path (N multiple of 128 -> no padding, free output reshape).
    out = classifier_forward(x, w1, b1, w2, b2)
    jax.block_until_ready(out)
    assert out.shape == (N, 1)
    assert jnp.allclose(out, ref, atol=1e-5, rtol=1e-5)

    # Ragged batch (N not a multiple of 128) -> padded/masked tail path.
    out_ragged = classifier_forward(x[:1000], w1, b1, w2, b2)
    jax.block_until_ready(out_ragged)
    assert out_ragged.shape == (1000, 1)
    assert jnp.allclose(out_ragged, ref[:1000], atol=1e-5, rtol=1e-5)

    # Tiny batch -> XLA fallback path.
    out_small = classifier_forward(x[:8], w1, b1, w2, b2)
    assert jnp.allclose(out_small, ref[:8], atol=1e-5, rtol=1e-5)

    print("KERNEL_OK")
</pallas_src>

<mosaic_0001>
module attributes {stable_mosaic.version = 11 : i64} {
  func.func @_classifier_kernel(%arg0: i32, %arg1: memref<8xf32, #tpu.memory_space<smem>>, %arg2: memref<4xf32, #tpu.memory_space<smem>>, %arg3: memref<4xf32, #tpu.memory_space<smem>>, %arg4: memref<1xf32, #tpu.memory_space<smem>>, %arg5: memref<2x8x128xf32, #tpu.memory_space<vmem>>, %arg6: memref<8x128xf32, #tpu.memory_space<vmem>>) attributes {dimension_semantics = [#tpu.dimension_semantics<parallel>], iteration_bounds = array<i64: 1>, scalar_prefetch = 0 : i64, scratch_operands = 0 : i64, tpu.core_type = #tpu.core_type<tc>, window_params = [{transform_indices = @transform_0, window_bounds = array<i64: 8>}, {transform_indices = @transform_1, window_bounds = array<i64: 4>}, {transform_indices = @transform_2, window_bounds = array<i64: 4>}, {transform_indices = @transform_3, window_bounds = array<i64: 1>}, {transform_indices = @transform_4, window_bounds = array<i64: 2, 8, 128>}, {transform_indices = @transform_5, window_bounds = array<i64: 8, 128>}]} {
    %c0 = arith.constant 0 : index
    %c0_0 = arith.constant 0 : index
    %c0_1 = arith.constant 0 : index
    %0 = vector.load %arg5[%c0, %c0_0, %c0_1] : memref<2x8x128xf32, #tpu.memory_space<vmem>>, vector<1x8x128xf32>
    %1 = vector.shape_cast %0 : vector<1x8x128xf32> to vector<8x128xf32>
    %c1 = arith.constant 1 : index
    %c0_2 = arith.constant 0 : index
    %c0_3 = arith.constant 0 : index
    %2 = vector.load %arg5[%c1, %c0_2, %c0_3] : memref<2x8x128xf32, #tpu.memory_space<vmem>>, vector<1x8x128xf32>
    %3 = vector.shape_cast %2 : vector<1x8x128xf32> to vector<8x128xf32>
    %c0_4 = arith.constant 0 : index
    %4 = memref.load %arg4[%c0_4] : memref<1xf32, #tpu.memory_space<smem>>
    %c0_5 = arith.constant 0 : index
    %5 = memref.load %arg1[%c0_5] : memref<8xf32, #tpu.memory_space<smem>>
    %6 = vector.broadcast %5 : f32 to vector<8x128xf32>
    %7 = arith.mulf %6, %1 : vector<8x128xf32>
    %c1_6 = arith.constant 1 : index
    %8 = memref.load %arg1[%c1_6] : memref<8xf32, #tpu.memory_space<smem>>
    %9 = vector.broadcast %8 : f32 to vector<8x128xf32>
    %10 = arith.mulf %9, %3 : vector<8x128xf32>
    %11 = arith.addf %7, %10 : vector<8x128xf32>
    %c0_7 = arith.constant 0 : index
    %12 = memref.load %arg2[%c0_7] : memref<4xf32, #tpu.memory_space<smem>>
    %13 = vector.broadcast %12 : f32 to vector<8x128xf32>
    %14 = arith.addf %11, %13 : vector<8x128xf32>
    %c0_8 = arith.constant 0 : index
    %15 = memref.load %arg3[%c0_8] : memref<4xf32, #tpu.memory_space<smem>>
    %16 = math.tanh %14 : vector<8x128xf32>
    %17 = vector.broadcast %15 : f32 to vector<8x128xf32>
    %18 = arith.mulf %17, %16 : vector<8x128xf32>
    %19 = vector.broadcast %4 : f32 to vector<8x128xf32>
    %20 = arith.addf %19, %18 : vector<8x128xf32>
    %c2 = arith.constant 2 : index
    %21 = memref.load %arg1[%c2] : memref<8xf32, #tpu.memory_space<smem>>
    %22 = vector.broadcast %21 : f32 to vector<8x128xf32>
    %23 = arith.mulf %22, %1 : vector<8x128xf32>
    %c3 = arith.constant 3 : index
    %24 = memref.load %arg1[%c3] : memref<8xf32, #tpu.memory_space<smem>>
    %25 = vector.broadcast %24 : f32 to vector<8x128xf32>
    %26 = arith.mulf %25, %3 : vector<8x128xf32>
    %27 = arith.addf %23, %26 : vector<8x128xf32>
    %c1_9 = arith.constant 1 : index
    %28 = memref.load %arg2[%c1_9] : memref<4xf32, #tpu.memory_space<smem>>
    %29 = vector.broadcast %28 : f32 to vector<8x128xf32>
    %30 = arith.addf %27, %29 : vector<8x128xf32>
    %c1_10 = arith.constant 1 : index
    %31 = memref.load %arg3[%c1_10] : memref<4xf32, #tpu.memory_space<smem>>
    %32 = math.tanh %30 : vector<8x128xf32>
    %33 = vector.broadcast %31 : f32 to vector<8x128xf32>
    %34 = arith.mulf %33, %32 : vector<8x128xf32>
    %35 = arith.addf %20, %34 : vector<8x128xf32>
    %c4 = arith.constant 4 : index
    %36 = memref.load %arg1[%c4] : memref<8xf32, #tpu.memory_space<smem>>
    %37 = vector.broadcast %36 : f32 to vector<8x128xf32>
    %38 = arith.mulf %37, %1 : vector<8x128xf32>
    %c5 = arith.constant 5 : index
    %39 = memref.load %arg1[%c5] : memref<8xf32, #tpu.memory_space<smem>>
    %40 = vector.broadcast %39 : f32 to vector<8x128xf32>
    %41 = arith.mulf %40, %3 : vector<8x128xf32>
    %42 = arith.addf %38, %41 : vector<8x128xf32>
    %c2_11 = arith.constant 2 : index
    %43 = memref.load %arg2[%c2_11] : memref<4xf32, #tpu.memory_space<smem>>
    %44 = vector.broadcast %43 : f32 to vector<8x128xf32>
    %45 = arith.addf %42, %44 : vector<8x128xf32>
    %c2_12 = arith.constant 2 : index
    %46 = memref.load %arg3[%c2_12] : memref<4xf32, #tpu.memory_space<smem>>
    %47 = math.tanh %45 : vector<8x128xf32>
    %48 = vector.broadcast %46 : f32 to vector<8x128xf32>
    %49 = arith.mulf %48, %47 : vector<8x128xf32>
    %50 = arith.addf %35, %49 : vector<8x128xf32>
    %c6 = arith.constant 6 : index
    %51 = memref.load %arg1[%c6] : memref<8xf32, #tpu.memory_space<smem>>
    %52 = vector.broadcast %51 : f32 to vector<8x128xf32>
    %53 = arith.mulf %52, %1 : vector<8x128xf32>
    %c7 = arith.constant 7 : index
    %54 = memref.load %arg1[%c7] : memref<8xf32, #tpu.memory_space<smem>>
    %55 = vector.broadcast %54 : f32 to vector<8x128xf32>
    %56 = arith.mulf %55, %3 : vector<8x128xf32>
    %57 = arith.addf %53, %56 : vector<8x128xf32>
    %c3_13 = arith.constant 3 : index
    %58 = memref.load %arg2[%c3_13] : memref<4xf32, #tpu.memory_space<smem>>
    %59 = vector.broadcast %58 : f32 to vector<8x128xf32>
    %60 = arith.addf %57, %59 : vector<8x128xf32>
    %c3_14 = arith.constant 3 : index
    %61 = memref.load %arg3[%c3_14] : memref<4xf32, #tpu.memory_space<smem>>
    %62 = math.tanh %60 : vector<8x128xf32>
    %63 = vector.broadcast %61 : f32 to vector<8x128xf32>
    %64 = arith.mulf %63, %62 : vector<8x128xf32>
    %65 = arith.addf %50, %64 : vector<8x128xf32>
    %cst = arith.constant 5.000000e-01 : f32
    %66 = vector.broadcast %cst : f32 to vector<8x128xf32>
    %67 = arith.mulf %66, %65 : vector<8x128xf32>
    %68 = math.tanh %67 : vector<8x128xf32>
    %cst_15 = arith.constant 5.000000e-01 : f32
    %69 = vector.broadcast %cst_15 : f32 to vector<8x128xf32>
    %70 = arith.mulf %69, %68 : vector<8x128xf32>
    %cst_16 = arith.constant 5.000000e-01 : f32
    %71 = vector.broadcast %cst_16 : f32 to vector<8x128xf32>
    %72 = arith.addf %70, %71 : vector<8x128xf32>
    %c0_17 = arith.constant 0 : index
    %c0_18 = arith.constant 0 : index
    %73 = vector.load %arg6[%c0_17, %c0_18] : memref<8x128xf32, #tpu.memory_space<vmem>>, vector<8x128xf32>
    tpu.vector_store %arg6[%c0_17, %c0_18], %72 {strides = array<i32>} : memref<8x128xf32, #tpu.memory_space<vmem>>, vector<8x128xf32>,
    return
  }
  func.func @transform_0(%arg0: i32) -> i32 {
    %c0_i32 = arith.constant 0 : i32
    %c0_i32_0 = arith.constant 0 : i32
    return %c0_i32 : i32
  }
  func.func @transform_1(%arg0: i32) -> i32 {
    %c0_i32 = arith.constant 0 : i32
    %c0_i32_0 = arith.constant 0 : i32
    return %c0_i32 : i32
  }
  func.func @transform_2(%arg0: i32) -> i32 {
    %c0_i32 = arith.constant 0 : i32
    %c0_i32_0 = arith.constant 0 : i32
    return %c0_i32 : i32
  }
  func.func @transform_3(%arg0: i32) -> i32 {
    %c0_i32 = arith.constant 0 : i32
    %c0_i32_0 = arith.constant 0 : i32
    return %c0_i32 : i32
  }
  func.func @transform_4(%arg0: i32) -> (i32, i32, i32) {
    %c0_i32 = arith.constant 0 : i32
    %c0_i32_0 = arith.constant 0 : i32
    %c0_i32_1 = arith.constant 0 : i32
    return %c0_i32, %arg0, %c0_i32_0 : i32, i32, i32
  }
  func.func @transform_5(%arg0: i32) -> (i32, i32) {
    %c0_i32 = arith.constant 0 : i32
    %c0_i32_0 = arith.constant 0 : i32
    return %arg0, %c0_i32 : i32, i32
  }
}

</mosaic_0001>

<llo_original>
// kernel: tpu_custom_call.1
$region0: #{tpu_custom_call.1}
  #allocation0 [shape = 'u32[]', space=smem, size = 0x4, offset = 0x4, fixed_abs, tag = 'smem constant byte address 0x4 - core index']
  #allocation1 [shape = 'u32[144,128]{1,0:T(1,128)}', space=vmem, size = 0x12000, scoped, tag = 'internal scratch']
  #allocation2 [shape = 'f32[1]{0:T(128)S(6)}', space=smem, size = 0x200, scoped, tag = 'scoped memory for tpu_custom_call.1']
  %s0 = inlined_call_operand.vmem [shape: f32[8], index: 0, kind: input, shape index: {}]
  %s1 = inlined_call_operand.vmem [shape: f32[4], index: 1, kind: input, shape index: {}]
  %s2 = inlined_call_operand.vmem [shape: f32[4], index: 2, kind: input, shape index: {}]
  %s3 = inlined_call_operand.<no memory space> [shape: f32[1], index: 3, kind: input, shape index: {}]
  %s4 = inlined_call_operand.hbm [shape: f32[2,8,128], index: 4, kind: input, shape index: {}]
  %s5 = inlined_call_operand.hbm [shape: f32[8,128], index: 5, kind: output, shape index: {}]
  %s6 = sld [smem:[#allocation0]]
  $region46: #{tpu_custom_call.1} parent=0
    _
  %s8 = ssub.s32 1, %s6
  %s9 = scalar_select 0, %s8, %s6
  %10 = sst [smem:[#allocation2]] %s3
  $region1: #{tpu_custom_call.1} parent=0
    #allocation3 [shape = 'u8[512]{0}', space=smem, size = 0x200, scoped, tag = 'input window, operand 0, single buffered']
    #allocation4 [shape = 's32[1]{0}', space=sflag, size = 0x4, scoped, tag = 'scoped memory for tpu_custom_call.1']
    #allocation5 [shape = 's32[1]{0}', space=sflag, size = 0x4, scoped, tag = 'scoped memory for tpu_custom_call.1']
    #allocation6 [shape = 's32[1]{0}', space=sflag, size = 0x4, scoped, tag = 'scoped memory for tpu_custom_call.1']
    #allocation7 [shape = 'u8[512]{0}', space=smem, size = 0x200, scoped, tag = 'input window, operand 1, single buffered']
    #allocation8 [shape = 's32[1]{0}', space=sflag, size = 0x4, scoped, tag = 'scoped memory for tpu_custom_call.1']
    #allocation9 [shape = 'u8[512]{0}', space=smem, size = 0x200, scoped, tag = 'input window, operand 2, single buffered']
    #allocation10 [shape = 'u8[8192]{0}', space=vmem, size = 0x2000, scoped, tag = 'input window, operand 4, single buffered']
    #allocation11 [shape = 'u8[4096]{0}', space=vmem, size = 0x1000, scoped, tag = 'output window, operand 0, single buffered']
    %11 = vsyncpa [#allocation6], 0
    %12 = vsyncpa [#allocation8], 0
    %13 = vsyncpa [#allocation4], 0
    %14 = vsyncpa [#allocation5], 0
    // Predicated region
    $region2: #{tpu_custom_call.1} parent=1 // pred_check
      _
    $region3: #{tpu_custom_call.1} parent=1 // pred_check_branch
      %16 = sbr.rel (0) target = $region5
    $region4: #{tpu_custom_call.1} parent=1 // pred_region
      %s18 = ssub.s32 16, 16
      %19 = vsyncadd [#allocation6], %s18
      %s21 = sshll.u32 %s0, 4
      %s22 = int_to_ptr.vmem [resolvable:$true] %s21
      %24 = dma.vmem_to_smem %s22, 16, [#allocation3], [#allocation6]
    $region5: #{tpu_custom_call.1} parent=1 // pred_fallthru
      _
    // Predicated region
    $region6: #{tpu_custom_call.1} parent=1 // pred_check
      _
    $region7: #{tpu_custom_call.1} parent=1 // pred_check_branch
      %26 = sbr.rel (0) target = $region9
    $region8: #{tpu_custom_call.1} parent=1 // pred_region
      %s28 = ssub.s32 16, 16
      %29 = vsyncadd [#allocation8], %s28
      %s31 = sshll.u32 %s1, 4
      %s32 = int_to_ptr.vmem [resolvable:$true] %s31
      %34 = dma.vmem_to_smem %s32, 16, [#allocation7], [#allocation8]
    $region9: #{tpu_custom_call.1} parent=1 // pred_fallthru
      _
    // Predicated region
    $region10: #{tpu_custom_call.1} parent=1 // pred_check
      _
    $region11: #{tpu_custom_call.1} parent=1 // pred_check_branch
      %36 = sbr.rel (0) target = $region13
    $region12: #{tpu_custom_call.1} parent=1 // pred_region
      %s38 = ssub.s32 16, 16
      %39 = vsyncadd [#allocation8], %s38
      %s41 = sshll.u32 %s2, 4
      %s42 = int_to_ptr.vmem [resolvable:$true] %s41
      %44 = dma.vmem_to_smem %s42, 16, [#allocation9], [#allocation8]
    $region13: #{tpu_custom_call.1} parent=1 // pred_fallthru
      _
    // Predicated region
    $region14: #{tpu_custom_call.1} parent=1 // pred_check
      _
    $region15: #{tpu_custom_call.1} parent=1 // pred_check_branch
      %46 = sbr.rel (0) target = $region17
    $region16: #{tpu_custom_call.1} parent=1 // pred_region
      _
    $region17: #{tpu_custom_call.1} parent=1 // pred_fallthru
      _
    // Predicated region
    $region18: #{tpu_custom_call.1} parent=1 // pred_check
      _
    $region19: #{tpu_custom_call.1} parent=1 // pred_check_branch
      %48 = sbr.rel (0) target = $region21
    $region20: #{tpu_custom_call.1} parent=1 // pred_region
      %s50 = ssub.s32 256, 256
      %51 = vsyncadd [#allocation4], %s50
      %s52 = sshll.u32 [#allocation10], 4
      %s53 = int_to_ptr.vmem [resolvable:$true] %s52
      %58 = dma.hbm_to_vmem [thread:$0]  %s4, 256, %s53, [#allocation4], 128, 128, 8
    $region21: #{tpu_custom_call.1} parent=1 // pred_fallthru
      _
    // Predicated region
    $region22: #{tpu_custom_call.1} parent=1 // pred_check
      _
    $region23: #{tpu_custom_call.1} parent=1 // pred_check_branch
      %60 = sbr.rel (0) target = $region25
    $region24: #{tpu_custom_call.1} parent=1 // pred_region
      %61 = dma.done [#allocation6], 16
    $region25: #{tpu_custom_call.1} parent=1 // pred_fallthru
      _
    // Predicated region
    $region26: #{tpu_custom_call.1} parent=1 // pred_check
      _
    $region27: #{tpu_custom_call.1} parent=1 // pred_check_branch
      %63 = sbr.rel (0) target = $region29
    $region28: #{tpu_custom_call.1} parent=1 // pred_region
      %64 = dma.done [#allocation8], 16
    $region29: #{tpu_custom_call.1} parent=1 // pred_fallthru
      _
    // Predicated region
    $region30: #{tpu_custom_call.1} parent=1 // pred_check
      _
    $region31: #{tpu_custom_call.1} parent=1 // pred_check_branch
      %66 = sbr.rel (0) target = $region33
    $region32: #{tpu_custom_call.1} parent=1 // pred_region
      %67 = dma.done [#allocation8], 16
    $region33: #{tpu_custom_call.1} parent=1 // pred_fallthru
      _
    // Predicated region
    $region34: #{tpu_custom_call.1} parent=1 // pred_check
      _
    $region35: #{tpu_custom_call.1} parent=1 // pred_check_branch
      %69 = sbr.rel (0) target = $region37
    $region36: #{tpu_custom_call.1} parent=1 // pred_region
      %70 = dma.done [#allocation4], 256
    $region37: #{tpu_custom_call.1} parent=1 // pred_fallthru
      _
    %71 = sfence
    %v72 = vld [vmem:[#allocation10] sm:$0xff]
    %s73 = scalar_lea.vmem [#allocation10], 8
    %v74 = vld [vmem:[%s73] sm:$0xff]
    %s75 = sld [smem:[#allocation2]]
    %s76 = sld [smem:[#allocation3]]
    %v77 = vstv %s76
    %v78 = vmul.f32 %v77, %v72
    %s79 = sld [smem:[#allocation3 + $0x1]]
    %v80 = vstv %s79
    %v81 = vmul.f32 %v80, %v74
    %v82 = vadd.f32 %v78, %v81
    %s83 = sld [smem:[#allocation7]]
    %v84 = vstv %s83
    %v85 = vadd.f32 %v82, %v84
    %s86 = sld [smem:[#allocation9]]
    %v87 = vtanh.pop %v85
    %v88 = vstv %s86
    %v89 = vmul.f32 %v88, %v87
    %v90 = vstv %s75
    %v91 = vadd.f32 %v90, %v89
    %s92 = sld [smem:[#allocation3 + $0x2]]
    %v93 = vstv %s92
    %v94 = vmul.f32 %v93, %v72
    %s95 = sld [smem:[#allocation3 + $0x3]]
    %v96 = vstv %s95
    %v97 = vmul.f32 %v96, %v74
    %v98 = vadd.f32 %v94, %v97
    %s99 = sld [smem:[#allocation7 + $0x1]]
    %v100 = vstv %s99
    %v101 = vadd.f32 %v98, %v100
    %s102 = sld [smem:[#allocation9 + $0x1]]
    %v103 = vtanh.pop %v101
    %v104 = vstv %s102
    %v105 = vmul.f32 %v104, %v103
    %v106 = vadd.f32 %v91, %v105
    %s107 = sld [smem:[#allocation3 + $0x4]]
    %v108 = vstv %s107
    %v109 = vmul.f32 %v108, %v72
    %s110 = sld [smem:[#allocation3 + $0x5]]
    %v111 = vstv %s110
    %v112 = vmul.f32 %v111, %v74
    %v113 = vadd.f32 %v109, %v112
    %s114 = sld [smem:[#allocation7 + $0x2]]
    %v115 = vstv %s114
    %v116 = vadd.f32 %v113, %v115
    %s117 = sld [smem:[#allocation9 + $0x2]]
    %v118 = vtanh.pop %v116
    %v119 = vstv %s117
    %v120 = vmul.f32 %v119, %v118
    %v121 = vadd.f32 %v106, %v120
    %s122 = sld [smem:[#allocation3 + $0x6]]
    %v123 = vstv %s122
    %v124 = vmul.f32 %v123, %v72
    %s125 = sld [smem:[#allocation3 + $0x7]]
    %v126 = vstv %s125
    %v127 = vmul.f32 %v126, %v74
    %v128 = vadd.f32 %v124, %v127
    %s129 = sld [smem:[#allocation7 + $0x3]]
    %v130 = vstv %s129
    %v131 = vadd.f32 %v128, %v130
    %s132 = sld [smem:[#allocation9 + $0x3]]
    %v133 = vtanh.pop %v131
    %v134 = vstv %s132
    %v135 = vmul.f32 %v134, %v133
    %v136 = vadd.f32 %v121, %v135
    %v137 = vmul.f32 %v136, 0.5
    %v138 = vtanh.pop %v137
    %v139 = vmul.f32 %v138, 0.5
    %v140 = vadd.f32 %v139, 0.5
    %141 = vst [vmem:[#allocation11] sm:$0xff] %v140
    // Predicated region
    $region38: #{tpu_custom_call.1} parent=1 // pred_check
      _
    $region39: #{tpu_custom_call.1} parent=1 // pred_check_branch
      %143 = sbr.rel (0) target = $region41
    $region40: #{tpu_custom_call.1} parent=1 // pred_region
      %s145 = ssub.s32 128, 128
      %146 = vsyncadd [#allocation5], %s145
      %s148 = sshll.u32 [#allocation11], 4
      %s149 = int_to_ptr.vmem [resolvable:$true] %s148
      %151 = dma.vmem_to_hbm [thread:$0]  %s149, 128, %s5, [#allocation5]
    $region41: #{tpu_custom_call.1} parent=1 // pred_fallthru
      _
    // Predicated region
    $region42: #{tpu_custom_call.1} parent=1 // pred_check
      _
    $region43: #{tpu_custom_call.1} parent=1 // pred_check_branch
      %153 = sbr.rel (0) target = $region45
    $region44: #{tpu_custom_call.1} parent=1 // pred_region
      %154 = dma.done [#allocation5], 128
    $region45: #{tpu_custom_call.1} parent=1 // pred_fallthru
      _
    %155 = vsyncpa [#allocation4], 1
    %156 = vsyncpa [#allocation5], 1
    %157 = vsyncpa [#allocation6], 1
    %158 = vsyncpa [#allocation8], 1

</llo_original>
